<compile_context>
chip_gen: v6e
topology: v6e:2x2x1
jax: 0.10.0
libtpu: 0.0.40
codegen_flags: <defaults>
</compile_context>

<pallas_src>
import functools

import jax
import jax.numpy as jnp
from jax import lax
from jax.experimental import pallas as pl
from jax.experimental.pallas import tpu as pltpu


def _grad3d_kernel(x_ref, out_ref, carry_ref, *, penalty, H, W, TD, KD,
                   w_d, w_h, w_w):
    """One grid step: i = flattened (b, c) index, kd = D-tile index.

    x_ref:     (1, TD, H*W) block of the input volume (native dtype).
    out_ref:   (1, 1, 1) f32 per-(b,c) partial result, resident across kd.
    carry_ref: (1, H*W) VMEM scratch holding the previous D-tile's last row.
    """
    kd = pl.program_id(1)
    HW = H * W

    x = x_ref[0]                                     # (TD, HW)

    def penalty_sum(d):
        # Reduce immediately -> at most one full-size temporary live at a time.
        if penalty == 'l2':
            t = d.astype(jnp.float32)
            t = t * t
        else:
            t = jnp.abs(d).astype(jnp.float32)
        return jnp.sum(t)                            # f32 scalar

    lane = lax.broadcasted_iota(jnp.int32, (TD, HW), 1)
    sub = lax.broadcasted_iota(jnp.int32, (TD, HW), 0)

    # W-direction diff (PyTorch `dz`): neighbour at lane+1; invalid at w==W-1
    # (roll wraps there).  roll goes to the XLU; subtract/mask stay on the VPU.
    d = pltpu.roll(x, shift=HW - 1, axis=1) - x
    d = jnp.where((lane % W) != (W - 1), d, jnp.zeros_like(d))
    acc = w_w * penalty_sum(d)

    # H-direction diff (PyTorch `dx`): neighbour at lane+W; invalid at h==H-1.
    d = pltpu.roll(x, shift=HW - W, axis=1) - x
    d = jnp.where(lane < (H - 1) * W, d, jnp.zeros_like(d))
    acc = acc + w_h * penalty_sum(d)

    # D-direction diff (PyTorch `dy`) inside this tile: neighbour at sub+1.
    d = pltpu.roll(x, shift=TD - 1, axis=0) - x
    d = jnp.where(sub < (TD - 1), d, jnp.zeros_like(d))
    acc = acc + w_d * penalty_sum(d)

    @pl.when(kd == 0)
    def _():
        out_ref[...] = jnp.zeros_like(out_ref)

    if KD > 1:
        # Cross-tile D diff: first row of this tile vs. last row of the
        # previous tile (carried in VMEM).  kd is the innermost grid axis, so
        # the carry never leaks across (b, c).
        @pl.when(kd > 0)
        def _():
            db = x[0:1, :] - carry_ref[...]
            out_ref[...] = out_ref[...] + w_d * penalty_sum(db)

        carry_ref[...] = x[TD - 1:TD, :]

    out_ref[...] = out_ref[...] + acc


def _choose_d_tile(D, HW, itemsize, budget_bytes):
    """Largest D tile that (a) divides D, (b) is a multiple of 8 (or == D),
    and (c) keeps one block under the byte budget."""
    if D * HW * itemsize <= budget_bytes:
        return D
    for cand in range(8 * (D // 8), 0, -8):
        if D % cand == 0 and cand * HW * itemsize <= budget_bytes:
            return cand
    # TODO(synk): pathological D (e.g. large prime) with huge H*W falls back to
    # a full-depth block and may need a raised vmem_limit_bytes.
    return D


def grad3d(y_pred, penalty='l1', loss_mult=None, *, tile_budget_bytes=4 << 20):
    """Pallas implementation of Grad3d.forward. y_pred: [B, C, D, H, W]."""
    B, C, D, H, W = y_pred.shape
    BC, HW = B * C, H * W
    itemsize = jnp.dtype(y_pred.dtype).itemsize

    # Contiguous (free) reshape: lane axis becomes H*W (lane-dense).
    y2 = y_pred.reshape(BC, D, HW)

    TD = _choose_d_tile(D, HW, itemsize, tile_budget_bytes)
    KD = D // TD

    # Per-difference element counts (match the PyTorch means exactly).
    n_h = B * C * D * (H - 1) * W        # torch `dx`
    n_d = B * C * (D - 1) * H * W        # torch `dy`
    n_w = B * C * D * H * (W - 1)        # torch `dz`
    w_h = (1.0 / n_h) if n_h > 0 else float('nan')
    w_d = (1.0 / n_d) if n_d > 0 else float('nan')
    w_w = (1.0 / n_w) if n_w > 0 else float('nan')

    kernel = functools.partial(
        _grad3d_kernel, penalty=penalty, H=H, W=W, TD=TD, KD=KD,
        w_d=w_d, w_h=w_h, w_w=w_w)

    partials = pl.pallas_call(
        kernel,
        out_shape=jax.ShapeDtypeStruct((BC, 1, 1), jnp.float32),
        grid_spec=pltpu.PrefetchScalarGridSpec(
            num_scalar_prefetch=0,
            grid=(BC, KD),
            in_specs=[pl.BlockSpec((1, TD, HW), lambda i, k: (i, k, 0))],
            out_specs=pl.BlockSpec((1, 1, 1), lambda i, k: (i, 0, 0)),
            scratch_shapes=[pltpu.VMEM((1, HW), y2.dtype)],
        ),
        compiler_params=pltpu.CompilerParams(
            dimension_semantics=("parallel", "arbitrary"),
        ),
        cost_estimate=pl.CostEstimate(
            flops=12 * y_pred.size,
            transcendentals=0,
            bytes_accessed=y_pred.size * itemsize + BC * 4,
        ),
    )(y2)

    # mean(dx) + mean(dy) + mean(dz) == sum of pre-weighted per-(b,c) partials.
    grad = jnp.sum(partials) / 3.0
    if loss_mult is not None:
        grad = grad * loss_mult
    return grad


if __name__ == "__main__":
    def ref(x, penalty, loss_mult):
        dy = jnp.abs(x[:, :, 1:, :, :] - x[:, :, :-1, :, :])
        dx = jnp.abs(x[:, :, :, 1:, :] - x[:, :, :, :-1, :])
        dz = jnp.abs(x[:, :, :, :, 1:] - x[:, :, :, :, :-1])
        if penalty == 'l2':
            dy, dx, dz = dy * dy, dx * dx, dz * dz
        g = (jnp.mean(dx) + jnp.mean(dy) + jnp.mean(dz)) / 3.0
        if loss_mult is not None:
            g = g * loss_mult
        return g

    key = jax.random.PRNGKey(0)
    k1, k2 = jax.random.split(key)

    # Small 5-D volume: [batch=2, channels=4, depth=8, height=16, width=16].
    y_a = jax.random.normal(k1, (2, 4, 8, 16, 16), dtype=jnp.float32)
    out_l1 = grad3d(y_a, penalty='l1')
    out_l2 = grad3d(y_a, penalty='l2', loss_mult=0.5)
    jax.block_until_ready(out_l1)
    jax.block_until_ready(out_l2)
    assert jnp.allclose(out_l1, ref(y_a, 'l1', None), rtol=1e-4, atol=1e-6)
    assert jnp.allclose(out_l2, ref(y_a, 'l2', 0.5), rtol=1e-4, atol=1e-6)

    # Deeper volume with a tiny tile budget so the D-tiling + carry path runs
    # (TD=8, 4 D-tiles per (b, c)).
    y_b = jax.random.normal(k2, (1, 2, 32, 16, 16), dtype=jnp.float32)
    out_t = grad3d(y_b, penalty='l1', tile_budget_bytes=8 * 16 * 16 * 4)
    jax.block_until_ready(out_t)
    assert jnp.allclose(out_t, ref(y_b, 'l1', None), rtol=1e-4, atol=1e-6)

    print("KERNEL_OK")
</pallas_src>

<mosaic_0001>
module attributes {stable_mosaic.version = 11 : i64} {
  func.func @_grad3d_kernel(%arg0: i32, %arg1: i32, %arg2: memref<1x8x256xf32, #tpu.memory_space<vmem>>, %arg3: memref<1x1x1xf32, #tpu.memory_space<vmem>>, %arg4: memref<1x256xf32, #tpu.memory_space<vmem>>) attributes {dimension_semantics = [#tpu.dimension_semantics<parallel>, #tpu.dimension_semantics<arbitrary>], iteration_bounds = array<i64: 8, 1>, scalar_prefetch = 0 : i64, scratch_operands = 1 : i64, tpu.core_type = #tpu.core_type<tc>, window_params = [{transform_indices = @transform_0, window_bounds = array<i64: 1, 8, 256>}, {transform_indices = @transform_1, window_bounds = array<i64: 1, 1, 1>}]} {
    %c0 = arith.constant 0 : index
    %c0_0 = arith.constant 0 : index
    %c0_1 = arith.constant 0 : index
    %0 = vector.load %arg2[%c0, %c0_0, %c0_1] : memref<1x8x256xf32, #tpu.memory_space<vmem>>, vector<1x8x256xf32>
    %1 = vector.shape_cast %0 : vector<1x8x256xf32> to vector<8x256xf32>
    %2 = tpu.iota {dimensions = array<i32: 1>} : vector<8x256xi32>
    %3 = tpu.iota {dimensions = array<i32: 0>} : vector<8x256xi32>
    %c255_i32 = arith.constant 255 : i32
    %4 = tpu.dynamic_rotate %1 by %c255_i32 dim 1 : vector<8x256xf32>, i32 -> vector<8x256xf32>
    %5 = arith.subf %4, %1 : vector<8x256xf32>
    %c16_i32 = arith.constant 16 : i32
    %c0_i32 = arith.constant 0 : i32
    %6 = arith.cmpi eq, %c16_i32, %c0_i32 : i32
    %c1_i32 = arith.constant 1 : i32
    %7 = arith.select %6, %c1_i32, %c16_i32 : i32
    %8 = vector.broadcast %7 : i32 to vector<8x256xi32>
    %9 = arith.remsi %2, %8 : vector<8x256xi32>
    %c0_i32_2 = arith.constant 0 : i32
    %10 = vector.broadcast %c0_i32_2 : i32 to vector<8x256xi32>
    %11 = arith.cmpi ne, %9, %10 : vector<8x256xi32>
    %c0_i32_3 = arith.constant 0 : i32
    %12 = vector.broadcast %c0_i32_3 : i32 to vector<8x256xi32>
    %13 = arith.cmpi slt, %9, %12 : vector<8x256xi32>
    %c0_i32_4 = arith.constant 0 : i32
    %14 = arith.cmpi slt, %7, %c0_i32_4 : i32
    %15 = vector.broadcast %14 : i1 to vector<8x256xi1>
    %16 = vector.broadcast %15 : vector<8x256xi1> to vector<8x256xi1>
    %17 = arith.xori %13, %16 : vector<8x256xi1>
    %18 = arith.andi %17, %11 : vector<8x256xi1>
    %19 = vector.broadcast %7 : i32 to vector<8x256xi32>
    %20 = arith.addi %9, %19 : vector<8x256xi32>
    %21 = arith.select %18, %20, %9 : vector<8x256xi1>, vector<8x256xi32>
    %c15_i32 = arith.constant 15 : i32
    %22 = vector.broadcast %c15_i32 : i32 to vector<8x256xi32>
    %23 = arith.cmpi ne, %21, %22 : vector<8x256xi32>
    %cst = arith.constant 0.000000e+00 : f32
    %24 = vector.broadcast %cst : f32 to vector<8x256xf32>
    %25 = arith.select %23, %5, %24 : vector<8x256xi1>, vector<8x256xf32>
    %26 = math.absf %25 : vector<8x256xf32>
    %27 = vector.shape_cast %26 : vector<8x256xf32> to vector<1x8x256xf32>
    %cst_5 = arith.constant dense<0.000000e+00> : vector<1xf32>
    %28 = vector.multi_reduction <add>, %27, %cst_5 [1, 2] : vector<1x8x256xf32> to vector<1xf32>
    %29 = vector.shape_cast %28 : vector<1xf32> to vector<1x1x1xf32>
    %30 = vector.extract %29[0, 0, 0] : f32 from vector<1x1x1xf32>
    %cst_6 = arith.constant 6.510417E-5 : f32
    %31 = arith.mulf %cst_6, %30 : f32
    %c240_i32 = arith.constant 240 : i32
    %32 = tpu.dynamic_rotate %1 by %c240_i32 dim 1 : vector<8x256xf32>, i32 -> vector<8x256xf32>
    %33 = arith.subf %32, %1 : vector<8x256xf32>
    %c240_i32_7 = arith.constant 240 : i32
    %34 = vector.broadcast %c240_i32_7 : i32 to vector<8x256xi32>
    %35 = arith.cmpi slt, %2, %34 : vector<8x256xi32>
    %cst_8 = arith.constant 0.000000e+00 : f32
    %36 = vector.broadcast %cst_8 : f32 to vector<8x256xf32>
    %37 = arith.select %35, %33, %36 : vector<8x256xi1>, vector<8x256xf32>
    %38 = math.absf %37 : vector<8x256xf32>
    %39 = vector.shape_cast %38 : vector<8x256xf32> to vector<1x8x256xf32>
    %cst_9 = arith.constant dense<0.000000e+00> : vector<1xf32>
    %40 = vector.multi_reduction <add>, %39, %cst_9 [1, 2] : vector<1x8x256xf32> to vector<1xf32>
    %41 = vector.shape_cast %40 : vector<1xf32> to vector<1x1x1xf32>
    %42 = vector.extract %41[0, 0, 0] : f32 from vector<1x1x1xf32>
    %cst_10 = arith.constant 6.510417E-5 : f32
    %43 = arith.mulf %cst_10, %42 : f32
    %44 = arith.addf %31, %43 : f32
    %c7_i32 = arith.constant 7 : i32
    %45 = tpu.dynamic_rotate %1 by %c7_i32 dim 0 : vector<8x256xf32>, i32 -> vector<8x256xf32>
    %46 = arith.subf %45, %1 : vector<8x256xf32>
    %c7_i32_11 = arith.constant 7 : i32
    %47 = vector.broadcast %c7_i32_11 : i32 to vector<8x256xi32>
    %48 = arith.cmpi slt, %3, %47 : vector<8x256xi32>
    %cst_12 = arith.constant 0.000000e+00 : f32
    %49 = vector.broadcast %cst_12 : f32 to vector<8x256xf32>
    %50 = arith.select %48, %46, %49 : vector<8x256xi1>, vector<8x256xf32>
    %51 = math.absf %50 : vector<8x256xf32>
    %52 = vector.shape_cast %51 : vector<8x256xf32> to vector<1x8x256xf32>
    %cst_13 = arith.constant dense<0.000000e+00> : vector<1xf32>
    %53 = vector.multi_reduction <add>, %52, %cst_13 [1, 2] : vector<1x8x256xf32> to vector<1xf32>
    %54 = vector.shape_cast %53 : vector<1xf32> to vector<1x1x1xf32>
    %55 = vector.extract %54[0, 0, 0] : f32 from vector<1x1x1xf32>
    %cst_14 = arith.constant 6.97544674E-5 : f32
    %56 = arith.mulf %cst_14, %55 : f32
    %57 = arith.addf %44, %56 : f32
    %c0_i32_15 = arith.constant 0 : i32
    %58 = arith.cmpi eq, %arg1, %c0_i32_15 : i32
    %59 = arith.extui %58 : i1 to i32
    %c0_i32_16 = arith.constant 0 : i32
    %60 = arith.cmpi ne, %59, %c0_i32_16 : i32
    scf.if %60 {
      %cst_23 = arith.constant 0.000000e+00 : f32
      %65 = vector.broadcast %cst_23 : f32 to vector<1x1x1xf32>
      %c0_24 = arith.constant 0 : index
      %c0_25 = arith.constant 0 : index
      %c0_26 = arith.constant 0 : index
      %66 = vector.load %arg3[%c0_24, %c0_25, %c0_26] : memref<1x1x1xf32, #tpu.memory_space<vmem>>, vector<1x1x1xf32>
      tpu.vector_store %arg3[%c0_24, %c0_25, %c0_26], %65 {strides = array<i32>} : memref<1x1x1xf32, #tpu.memory_space<vmem>>, vector<1x1x1xf32>,
    } else {
    }
    %c0_17 = arith.constant 0 : index
    %c0_18 = arith.constant 0 : index
    %c0_19 = arith.constant 0 : index
    %61 = vector.load %arg3[%c0_17, %c0_18, %c0_19] : memref<1x1x1xf32, #tpu.memory_space<vmem>>, vector<1x1x1xf32>
    %62 = vector.broadcast %57 : f32 to vector<1x1x1xf32>
    %63 = arith.addf %61, %62 : vector<1x1x1xf32>
    %c0_20 = arith.constant 0 : index
    %c0_21 = arith.constant 0 : index
    %c0_22 = arith.constant 0 : index
    %64 = vector.load %arg3[%c0_20, %c0_21, %c0_22] : memref<1x1x1xf32, #tpu.memory_space<vmem>>, vector<1x1x1xf32>
    tpu.vector_store %arg3[%c0_20, %c0_21, %c0_22], %63 {strides = array<i32>} : memref<1x1x1xf32, #tpu.memory_space<vmem>>, vector<1x1x1xf32>,
    return
  }
  func.func @transform_0(%arg0: i32, %arg1: i32) -> (i32, i32, i32) {
    %c0_i32 = arith.constant 0 : i32
    %c0_i32_0 = arith.constant 0 : i32
    return %arg0, %arg1, %c0_i32 : i32, i32, i32
  }
  func.func @transform_1(%arg0: i32, %arg1: i32) -> (i32, i32, i32) {
    %c0_i32 = arith.constant 0 : i32
    %c0_i32_0 = arith.constant 0 : i32
    %c0_i32_1 = arith.constant 0 : i32
    return %arg0, %c0_i32, %c0_i32_0 : i32, i32, i32
  }
}

</mosaic_0001>

<llo_original>
// kernel: tpu_custom_call.1
$region0: #{tpu_custom_call.1}
  #allocation0 [shape = 'u32[]', space=smem, size = 0x4, offset = 0x4, fixed_abs, tag = 'smem constant byte address 0x4 - core index']
  #allocation1 [shape = 'u32[144,128]{1,0:T(1,128)}', space=vmem, size = 0x12000, scoped, tag = 'internal scratch']
  #allocation2 [shape = 'f32[1,256]{1,0:T(1,128)}', space=vmem, size = 0x400, scoped, tag = 'scratch operand']
  %s0 = inlined_call_operand.hbm [shape: f32[8,8,256], index: 0, kind: input, shape index: {}]
  %s1 = inlined_call_operand.vmem [shape: f32[8,1,1], index: 1, kind: output, shape index: {}]
  %s2 = sld [smem:[#allocation0]]
  $region45: #{tpu_custom_call.1} parent=0
    _
  %s4 = ssub.s32 1, %s2
  %s5 = scalar_select 0, %s4, %s2
  $region1: #{tpu_custom_call.1} parent=0
    #allocation3 [shape = 'u8[16384]{0}', space=vmem, size = 0x4000, scoped, tag = 'input window, operand 0']
    #allocation4 [shape = 's32[2]{0}', space=sflag, size = 0x8, scoped, tag = 'scoped memory for tpu_custom_call.1']
    %6 = vsyncpa [#allocation4], 0
    %s7 = scalar_lea.sflag [#allocation4], 1
    %8 = vsyncpa %s7, 0
    loop: start=0, step=1, limit=10
    $region2: #{tpu_custom_call.1} parent=1 // loop_pre_header
      _
    $region3: #{tpu_custom_call.1} parent=1 // loop_header
      %s10 = sphi 0, %s14
      %p11 = scmp.ge.s32.totalorder %s10, 10
      %s17 = sphi 0, %s29
      %s18 = sphi 0, %s25
      %s19 = sphi 0, %s17
      %s20 = sphi 0, %s18
      %s21 = sphi 0, %s19
      %s22 = sphi 0, %s20
      %s34 = sphi 0, %s36
      %s37 = sphi 0, %s34
      %s38 = sphi 0, %s37
      %s54 = sphi 0, %s38
      %s60 = sphi 0, %s62
      %s63 = sphi 0, %s60
      %s64 = sphi 0, %s63
      %s80 = sphi 0, %s64
    $region4: #{tpu_custom_call.1} parent=1 // loop_header_branch
      %13 = sbr.rel (%p11) target = $region8
    $region5: #{tpu_custom_call.1} parent=1 // loop_body
      %s15 = ssub.s32 %s10, 1
      %s16 = ssub.s32 %s10, 2
      %s23 = sadd.s32 1, %s18
      %p24 = scmp.ge.s32.totalorder %s23, 1
      %s25 = scalar_select %p24, 0, %s23
      %s26 = sadd.s32 1, %s17
      %s27 = scalar_select %p24, %s26, %s17
      %p28 = scmp.ge.s32.totalorder %s27, 8
      %s29 = scalar_select %p28, 0, %s27
      %s30 = ssub.s32 %s17, %s29
      %s31 = ssub.s32 %s18, %s25
      %s32 = sor.u32 %s30, %s31
      %p33 = scmp.eq.s32.totalorder %s32, 0
      %s35 = sadd.s32 %s34, 1
      %s36 = scalar_select %p33, %s34, %s35
      %p39 = pneg %p33
      %p40 = scmp.eq.s32.totalorder %s10, 7
      %p41 = por %p39, %p40
      %p42 = scmp.ne.s32.totalorder %s34, %s37
      %p43 = scmp.eq.s32.totalorder %s10, 0
      %p44 = por %p42, %p43
      %p45 = scmp.ne.s32.totalorder %s34, %s37
      %p46 = scmp.eq.s32.totalorder %s15, 7
      %p47 = por %p45, %p46
      %p48 = scmp.ne.s32.totalorder %s37, %s38
      %p49 = scmp.eq.s32.totalorder %s15, 0
      %p50 = por %p48, %p49
      %p51 = scmp.ne.s32.totalorder %s37, %s38
      %p52 = scmp.eq.s32.totalorder %s16, 7
      %p53 = por %p51, %p52
      %p55 = scmp.ne.s32.totalorder %s38, %s54
      %p56 = scmp.eq.s32.totalorder %s16, 0
      %p57 = por %p55, %p56
      %s58 = ssub.s32 %s17, %s29
      %p59 = scmp.eq.s32.totalorder %s58, 0
      %s61 = sadd.s32 %s60, 1
      %s62 = scalar_select %p59, %s60, %s61
      %p65 = pneg %p59
      %p66 = scmp.eq.s32.totalorder %s10, 7
      %p67 = por %p65, %p66
      %p68 = scmp.ne.s32.totalorder %s60, %s63
      %p69 = scmp.eq.s32.totalorder %s10, 0
      %p70 = por %p68, %p69
      %p71 = scmp.ne.s32.totalorder %s60, %s63
      %p72 = scmp.eq.s32.totalorder %s15, 7
      %p73 = por %p71, %p72
      %p74 = scmp.ne.s32.totalorder %s63, %s64
      %p75 = scmp.eq.s32.totalorder %s15, 0
      %p76 = por %p74, %p75
      %p77 = scmp.ne.s32.totalorder %s63, %s64
      %p78 = scmp.eq.s32.totalorder %s16, 7
      %p79 = por %p77, %p78
      %p81 = scmp.ne.s32.totalorder %s64, %s80
      %p82 = scmp.eq.s32.totalorder %s16, 0
      %p83 = por %p81, %p82
      %p84 = scmp.le.s32.totalorder 1, %s10
      %p85 = scmp.lt.s32.totalorder %s10, 9
      %p86 = pnand %p84, %p85
      %p87 = pneg %p86
      // Predicated region
      $region9: #{tpu_custom_call.1} parent=5 // pred_check
        _
      $region10: #{tpu_custom_call.1} parent=5 // pred_check_branch
        %89 = sbr.rel (%p86) target = $region12
      $region11: #{tpu_custom_call.1} parent=5 // pred_region
        %s90 = ssub.s32 %s10, 1
      $region12: #{tpu_custom_call.1} parent=5 // pred_fallthru
        _
      %p91 = scmp.lt.s32.totalorder %s10, 8
      // Predicated region
      $region13: #{tpu_custom_call.1} parent=5 // pred_check
        %p92 = pneg %p91
      $region14: #{tpu_custom_call.1} parent=5 // pred_check_branch
        %94 = sbr.rel (%p92) target = $region16
      $region15: #{tpu_custom_call.1} parent=5 // pred_region
        // Predicated region
        $region17: #{tpu_custom_call.1} parent=15 // pred_check
          %p95 = pneg %p44
        $region18: #{tpu_custom_call.1} parent=15 // pred_check_branch
          %97 = sbr.rel (%p95) target = $region20
        $region19: #{tpu_custom_call.1} parent=15 // pred_region
          %s98 = sand.u32 %s34, 1
          %s99 = scalar_lea.sflag [#allocation4], %s98
          %s100 = sand.u32 %s34, 1
          %s101 = smul.addr %s100, 16
          %s102 = scalar_lea.vmem [#allocation3], %s101
          %s104 = ssub.s32 256, 256
          %105 = vsyncadd %s99, %s104
          %s106 = smul.addr %s18, 2
          %s107 = smul.addr %s17, 2
          %s108 = sadd.s32 %s106, %s107
          %s109 = smul.addr %s108, 128
          %s110 = scalar_lea.hbm %s0, %s109
          %s112 = sshll.u32 %s102, 4
          %s113 = int_to_ptr.vmem [resolvable:$true] %s112
          %115 = dma.hbm_to_vmem [thread:$0]  %s110, 256, %s113, %s99
        $region20: #{tpu_custom_call.1} parent=15 // pred_fallthru
          _
      $region16: #{tpu_custom_call.1} parent=5 // pred_fallthru
        _
      %p116 = scmp.le.s32.totalorder 1, %s10
      %p117 = scmp.lt.s32.totalorder %s10, 9
      %p118 = pnand %p116, %p117
      %p119 = pneg %p118
      // Predicated region
      $region21: #{tpu_custom_call.1} parent=5 // pred_check
        _
      $region22: #{tpu_custom_call.1} parent=5 // pred_check_branch
        %121 = sbr.rel (%p118) target = $region24
      $region23: #{tpu_custom_call.1} parent=5 // pred_region
        %s122 = ssub.s32 %s10, 1
        %s123 = sand.u32 %s37, 1
        %s124 = scalar_lea.sflag [#allocation4], %s123
        %s125 = sand.u32 %s37, 1
        %s126 = smul.addr %s125, 16
        %s127 = scalar_lea.vmem [#allocation3], %s126
        // Predicated region
        $region25: #{tpu_custom_call.1} parent=23 // pred_check
          %p128 = pneg %p50
        $region26: #{tpu_custom_call.1} parent=23 // pred_check_branch
          %130 = sbr.rel (%p128) target = $region28
        $region27: #{tpu_custom_call.1} parent=23 // pred_region
          %131 = dma.done %s124, 256
        $region28: #{tpu_custom_call.1} parent=23 // pred_fallthru
          _
        %s132 = sand.u32 %s37, 1
        %s133 = scalar_lea.sflag [#allocation4], %s132
        %s134 = sand.u32 %s37, 1
        %s135 = smul.addr %s134, 16
        %s136 = scalar_lea.vmem [#allocation3], %s135
        %p137 = pneg %p50
        %p138 = pneg %p47
        %p139 = pneg %p76
        %p140 = pneg %p73
        %p141 = scmp.lt.s32.totalorder %s19, 7
        %s142 = scalar_select %p141, %s19, 7
        %s143 = scalar_lea.vmem %s1, %s142
        %p144 = scmp.lt.s32.totalorder %s19, 7
        %s145 = scalar_select %p144, %s19, 7
        %s146 = scalar_lea.vmem %s1, %s145
        %v147 = vld [vmem:[%s127] sm:$0xff]
        %v148 = vld [vmem:[%s127 + $0x8] sm:$0xff]
        %v149 = vlaneseq
        %v150 = vand.u32 %v149, 127
        %v151 = vadd.s32 %v150, 128
        %v152 = vlaneseq
        %v153 = vshrl.u32 %v152, 7
        %154 = vrot.lane.b32.xlu0 %v147, 127
        %v155 = vpop.permute.xlu0 %154
        %156 = vrot.lane.b32.xlu0 %v148, 127
        %v157 = vpop.permute.xlu0 %156
        %vm158 = vcmp.lt.s32.totalorder %v150, 127
        %v159 = vsel %vm158, %v155, %v157
        %v160 = vsel %vm158, %v157, %v155
        %v161 = vsub.f32 %v159, %v147
        %v162 = vsub.f32 %v160, %v148
        %vm163 = vcmp.lt.s32.totalorder %v150, 0
        %v164 = vsub.s32 0, %v150
        %v165 = vsel %vm163, %v164, %v150
        %v166 = vshrl.u32 %v165, 4
        %v167 = vand.u32 %v165, 15
        %v168 = vsub.s32 0, %v167
        %v169 = vsel %vm163, %v168, %v167
        %vm170 = vcmp.lt.s32.totalorder %v151, 0
        %v171 = vsub.s32 0, %v151
        %v172 = vsel %vm170, %v171, %v151
        %v173 = vshrl.u32 %v172, 4
        %v174 = vand.u32 %v172, 15
        %v175 = vsub.s32 0, %v174
        %v176 = vsel %vm170, %v175, %v174
        %vm177 = vcmp.ne.s32.totalorder %v169, 0
        %vm178 = vcmp.ne.s32.totalorder %v176, 0
        %vm179 = vcmp.lt.s32.totalorder %v169, 0
        %vm180 = vcmp.lt.s32.totalorder %v176, 0
        %vm181 = vmand %vm179, %vm177
        %vm182 = vmand %vm180, %vm178
        %v183 = vadd.s32 %v169, 16
        %v184 = vadd.s32 %v176, 16
        %v185 = vsel %vm181, %v183, %v169
        %v186 = vsel %vm182, %v184, %v176
        %vm187 = vcmp.ne.s32.totalorder %v185, 15
        %vm188 = vcmp.ne.s32.totalorder %v186, 15
        %v189 = vsel %vm187, %v161, 0.0
        %v190 = vsel %vm188, %v162, 0.0
        %v191 = vand.u32 2147483647, %v189
        %v192 = vand.u32 2147483647, %v190
        %v193 = vadd.f32 %v191, %v192
        %194 = vadd.xlane.f32.xlu0 %v193
        %v195 = vpop.xlane.xlu0 %194
        %v196 = vrot.slane %v195, 4
        %v197 = vadd.f32 %v195, %v196
        %v198 = vrot.slane %v197, 2
        %v199 = vadd.f32 %v197, %v198
        %v200 = vrot.slane %v199, 1
        %v201 = vadd.f32 %v199, %v200
        %s202 = vtos %v201
        %s203 = smul.f32 %s202, 6.510417e-05
        %204 = vrot.lane.b32.xlu0 %v147, 112
        %v205 = vpop.permute.xlu0 %204
        %206 = vrot.lane.b32.xlu0 %v148, 112
        %v207 = vpop.permute.xlu0 %206
        %vm208 = vcmp.lt.s32.totalorder %v150, 112
        %v209 = vsel %vm208, %v205, %v207
        %v210 = vsel %vm208, %v207, %v205
        %v211 = vsub.f32 %v209, %v147
        %v212 = vsub.f32 %v210, %v148
        %vm213 = vcmp.lt.s32.totalorder %v150, 240
        %vm214 = vcmp.lt.s32.totalorder %v151, 240
        %v215 = vsel %vm213, %v211, 0.0
        %v216 = vsel %vm214, %v212, 0.0
        %v217 = vand.u32 2147483647, %v215
        %v218 = vand.u32 2147483647, %v216
        %v219 = vadd.f32 %v217, %v218
        %220 = vadd.xlane.f32.xlu0 %v219
        %v221 = vpop.xlane.xlu0 %220
        %v222 = vrot.slane %v221, 4
        %v223 = vadd.f32 %v221, %v222
        %v224 = vrot.slane %v223, 2
        %v225 = vadd.f32 %v223, %v224
        %v226 = vrot.slane %v225, 1
        %v227 = vadd.f32 %v225, %v226
        %s228 = vtos %v227
        %s229 = smul.f32 %s228, 6.510417e-05
        %s230 = sadd.f32 %s203, %s229
        %v231 = vrot.slane %v147, 1
        %v232 = vrot.slane %v148, 1
        %v233 = vsub.f32 %v231, %v147
        %v234 = vsub.f32 %v232, %v148
        %vm235 = vcmp.lt.s32.totalorder %v153, 7
        %v236 = vsel %vm235, %v233, 0.0
        %v237 = vsel %vm235, %v234, 0.0
        %v238 = vand.u32 2147483647, %v236
        %v239 = vand.u32 2147483647, %v237
        %v240 = vadd.f32 %v238, %v239
        %241 = vadd.xlane.f32.xlu0 %v240
        %v242 = vpop.xlane.xlu0 %241
        %v243 = vrot.slane %v242, 4
        %v244 = vadd.f32 %v242, %v243
        %v245 = vrot.slane %v244, 2
        %v246 = vadd.f32 %v244, %v245
        %v247 = vrot.slane %v246, 1
        %v248 = vadd.f32 %v246, %v247
        %s249 = vtos %v248
        %s250 = smul.f32 %s249, 6.975447e-05
        %s251 = sadd.f32 %s230, %s250
        %p252 = scmp.eq.s32.totalorder %s20, 0
        // Predicated region
        $region29: #{tpu_custom_call.1} parent=23 // pred_check
          %p253 = pneg %p252
        $region30: #{tpu_custom_call.1} parent=23 // pred_check_branch
          %255 = sbr.rel (%p253) target = $region32
        $region31: #{tpu_custom_call.1} parent=23 // pred_region
          %vm256 = vcmask 0
          %257 = vst.msk [vmem:[%s146] sm:$0x1] %vm256, 0.0
        $region32: #{tpu_custom_call.1} parent=23 // pred_fallthru
          _
        %v258 = vld [vmem:[%s146] sm:$0x1]
        %v259 = vstv %s251
        %v260 = vadd.f32 %v258, %v259
        %vm261 = vcmask 0
        %262 = vst.msk [vmem:[%s146] sm:$0x1] %vm261, %v260
        %p263 = scmp.lt.s32.totalorder %s19, 7
        %s264 = scalar_select %p263, %s19, 7
        %s265 = scalar_lea.vmem %s1, %s264
        // Predicated region
        $region33: #{tpu_custom_call.1} parent=23 // pred_check
          %p266 = pneg %p73
        $region34: #{tpu_custom_call.1} parent=23 // pred_check_branch
          %268 = sbr.rel (%p266) target = $region36
        $region35: #{tpu_custom_call.1} parent=23 // pred_region
          _
        $region36: #{tpu_custom_call.1} parent=23 // pred_fallthru
          _
      $region24: #{tpu_custom_call.1} parent=5 // pred_fallthru
        _
      %p269 = scmp.le.s32.totalorder 2, %s10
      // Predicated region
      $region37: #{tpu_custom_call.1} parent=5 // pred_check
        %p270 = pneg %p269
      $region38: #{tpu_custom_call.1} parent=5 // pred_check_branch
        %272 = sbr.rel (%p270) target = $region40
      $region39: #{tpu_custom_call.1} parent=5 // pred_region
        %s273 = ssub.s32 %s10, 2
        // Predicated region
        $region41: #{tpu_custom_call.1} parent=39 // pred_check
          %p274 = pneg %p79
        $region42: #{tpu_custom_call.1} parent=39 // pred_check_branch
          %276 = sbr.rel (%p274) target = $region44
        $region43: #{tpu_custom_call.1} parent=39 // pred_region
          %p277 = scmp.lt.s32.totalorder %s21, 7
          %s278 = scalar_select %p277, %s21, 7
          %s279 = scalar_lea.vmem %s1, %s278
        $region44: #{tpu_custom_call.1} parent=39 // pred_fallthru
          _
      $region40: #{tpu_custom_call.1} parent=5 // pred_fallthru
        _
    $region6: #{tpu_custom_call.1} parent=1 // loop_footer
      %s14 = sadd.s32 1, %s10
    $region7: #{tpu_custom_call.1} parent=1 // loop_footer_branch
      %9 = sbr.rel target = $region3
    $region8: #{tpu_custom_call.1} parent=1 // loop_exit
      _
    %280 = vsyncpa [#allocation4], 1
    %s281 = scalar_lea.sflag [#allocation4], 1
    %282 = vsyncpa %s281, 1

</llo_original>
